<compile_context>
chip_gen: v7x
topology: tpu7x:2x2x1
jax: 0.10.0
libtpu: 0.0.40
codegen_flags: <defaults>
</compile_context>

<pallas_src>
import jax
import jax.numpy as jnp
from jax.experimental import pallas as pl
from jax.experimental.pallas import tpu as pltpu


def cbow_kernel(idx_ref, emb_ref, wt_ref, bias_ref, out_ref):
    # idx_ref : VMEM (B_TILE, C) int32   token ids for this batch tile
    # emb_ref : VMEM (V, E)              embedding table (fully resident)
    # wt_ref  : VMEM (E, V)              linear weight, transposed
    # bias_ref: VMEM (1, V)
    # out_ref : VMEM (B_TILE, V)         lane/sublane-dense logits tile
    b_tile = out_ref.shape[0]
    vocab = emb_ref.shape[0]
    n_ctx = idx_ref.shape[1]
    inv_c = jnp.float32(1.0 / n_ctx)

    ids = idx_ref[...]                                           # (B_TILE, C)
    vocab_iota = jax.lax.broadcasted_iota(jnp.int32, (b_tile, vocab), 1)

    # counts[b, v] = how many of the C context tokens of row b equal v.
    # Static unroll over the (small) context width; pure VPU compares/adds.
    counts = jnp.zeros((b_tile, vocab), jnp.float32)
    for c in range(n_ctx):
        counts = counts + (ids[:, c:c + 1] == vocab_iota).astype(jnp.float32)

    # Mean context embedding as one batched MXU matmul: (B_T, V) @ (V, E).
    mean_emb = jnp.dot(counts * inv_c, emb_ref[...],
                       preferred_element_type=jnp.float32)       # (B_T, E)

    # Logits: (B_T, E) @ (E, V) + bias, written once as a dense tile.
    logits = jnp.dot(mean_emb, wt_ref[...],
                     preferred_element_type=jnp.float32)
    out_ref[...] = (logits + bias_ref[...]).astype(out_ref.dtype)


def cbow_forward(indices, emb_weight, lin_weight, lin_bias, *, b_tile=None):
    """indices: (B, C) int; emb_weight: (V, E); lin_weight: (V, E); lin_bias: (V,)"""
    B, C = indices.shape
    V, E = emb_weight.shape
    assert lin_weight.shape == (V, E) and lin_bias.shape == (V,)

    if b_tile is None:
        # MXU-native M is 128 (v5e) / 256 (v6e, v7x); cap to the (sublane
        # aligned) batch so tiny batches don't over-pad.
        b_tile = min(128, ((B + 7) // 8) * 8)
    n_tiles = pl.cdiv(B, b_tile)
    B_pad = n_tiles * b_tile

    idx = indices.astype(jnp.int32)
    if B_pad != B:
        # Padded rows use token 0 and are sliced off after the call.
        idx = jnp.pad(idx, ((0, B_pad - B), (0, 0)))

    wt = lin_weight.T                 # (E, V); MXU-friendly x @ W^T layout
    bias2 = lin_bias.reshape(1, V)

    grid_spec = pltpu.PrefetchScalarGridSpec(
        num_scalar_prefetch=0,
        grid=(n_tiles,),
        in_specs=[
            # per-tile token ids as a vectorized VMEM int32 block
            pl.BlockSpec((b_tile, C), lambda i: (i, 0)),
            # full embedding table resident in VMEM (128 KiB at V=256, E=128)
            pl.BlockSpec((V, E), lambda i: (0, 0)),
            # full transposed linear weight, resident every step
            pl.BlockSpec((E, V), lambda i: (0, 0)),
            # bias
            pl.BlockSpec((1, V), lambda i: (0, 0)),
        ],
        out_specs=pl.BlockSpec((b_tile, V), lambda i: (i, 0)),
    )

    out = pl.pallas_call(
        cbow_kernel,
        out_shape=jax.ShapeDtypeStruct((B_pad, V), jnp.float32),
        grid_spec=grid_spec,
        compiler_params=pltpu.CompilerParams(
            dimension_semantics=("parallel",)),
    )(idx, emb_weight, wt, bias2)

    return out[:B]


if __name__ == "__main__":
    # Small, deterministic synthetic setup (vocab_size=256, embedding_size=128).
    B, C = 40, 4         # batch, context window (2 left + 2 right, like CBOW)
    V, E = 256, 128      # vocab_size, embedding_size

    key = jax.random.PRNGKey(0)
    k_idx, k_emb, k_w, k_b = jax.random.split(key, 4)

    indices = jax.random.randint(k_idx, (B, C), 0, V, dtype=jnp.int32)
    # nn.Embedding default init: N(0, 1)
    emb_weight = jax.random.normal(k_emb, (V, E), dtype=jnp.float32)
    # nn.Linear default init: U(-1/sqrt(E), 1/sqrt(E))
    bound = 1.0 / (E ** 0.5)
    lin_weight = jax.random.uniform(k_w, (V, E), jnp.float32, -bound, bound)
    lin_bias = jax.random.uniform(k_b, (V,), jnp.float32, -bound, bound)

    # b_tile=16 exercises padding (40 -> 48) and a multi-step "parallel" grid.
    out = cbow_forward(indices, emb_weight, lin_weight, lin_bias, b_tile=16)
    out = jax.block_until_ready(out)

    # Pure-JAX reference of the PyTorch forward:
    # embeddings(inputs).mean(1).squeeze(1) @ W.T + b
    ref = emb_weight[indices].mean(axis=1) @ lin_weight.T + lin_bias
    assert out.shape == (B, V)
    assert jnp.allclose(out, ref, atol=1e-4, rtol=1e-4), "mismatch vs reference"

    print("KERNEL_OK")
</pallas_src>

<mosaic_0001>
module attributes {stable_mosaic.version = 11 : i64} {
  func.func @cbow_kernel(%arg0: i32, %arg1: memref<16x4xi32, #tpu.memory_space<vmem>>, %arg2: memref<256x128xf32, #tpu.memory_space<vmem>>, %arg3: memref<128x256xf32, #tpu.memory_space<vmem>>, %arg4: memref<1x256xf32, #tpu.memory_space<vmem>>, %arg5: memref<16x256xf32, #tpu.memory_space<vmem>>) attributes {dimension_semantics = [#tpu.dimension_semantics<parallel>], iteration_bounds = array<i64: 3>, scalar_prefetch = 0 : i64, scratch_operands = 0 : i64, tpu.core_type = #tpu.core_type<tc>, window_params = [{transform_indices = @transform_0, window_bounds = array<i64: 16, 4>}, {pipeline_mode = #tpu.pipeline_mode<synchronous>, transform_indices = @transform_1, window_bounds = array<i64: 256, 128>}, {pipeline_mode = #tpu.pipeline_mode<synchronous>, transform_indices = @transform_2, window_bounds = array<i64: 128, 256>}, {pipeline_mode = #tpu.pipeline_mode<synchronous>, transform_indices = @transform_3, window_bounds = array<i64: 1, 256>}, {transform_indices = @transform_4, window_bounds = array<i64: 16, 256>}]} {
    %c0 = arith.constant 0 : index
    %c0_0 = arith.constant 0 : index
    %0 = vector.load %arg1[%c0, %c0_0] : memref<16x4xi32, #tpu.memory_space<vmem>>, vector<16x4xi32>
    %1 = tpu.iota {dimensions = array<i32: 1>} : vector<16x256xi32>
    %cst = arith.constant 0.000000e+00 : f32
    %2 = vector.broadcast %cst : f32 to vector<16x256xf32>
    %3 = vector.extract_strided_slice %0 {offsets = [0, 0], sizes = [16, 1], strides = [1, 1]} : vector<16x4xi32> to vector<16x1xi32>
    %4 = vector.broadcast %3 : vector<16x1xi32> to vector<16x256xi32>
    %5 = arith.cmpi eq, %4, %1 : vector<16x256xi32>
    %6 = arith.extui %5 : vector<16x256xi1> to vector<16x256xi32>
    %7 = arith.sitofp %6 : vector<16x256xi32> to vector<16x256xf32>
    %8 = arith.addf %2, %7 : vector<16x256xf32>
    %9 = vector.extract_strided_slice %0 {offsets = [0, 1], sizes = [16, 1], strides = [1, 1]} : vector<16x4xi32> to vector<16x1xi32>
    %10 = vector.broadcast %9 : vector<16x1xi32> to vector<16x256xi32>
    %11 = arith.cmpi eq, %10, %1 : vector<16x256xi32>
    %12 = arith.extui %11 : vector<16x256xi1> to vector<16x256xi32>
    %13 = arith.sitofp %12 : vector<16x256xi32> to vector<16x256xf32>
    %14 = arith.addf %8, %13 : vector<16x256xf32>
    %15 = vector.extract_strided_slice %0 {offsets = [0, 2], sizes = [16, 1], strides = [1, 1]} : vector<16x4xi32> to vector<16x1xi32>
    %16 = vector.broadcast %15 : vector<16x1xi32> to vector<16x256xi32>
    %17 = arith.cmpi eq, %16, %1 : vector<16x256xi32>
    %18 = arith.extui %17 : vector<16x256xi1> to vector<16x256xi32>
    %19 = arith.sitofp %18 : vector<16x256xi32> to vector<16x256xf32>
    %20 = arith.addf %14, %19 : vector<16x256xf32>
    %21 = vector.extract_strided_slice %0 {offsets = [0, 3], sizes = [16, 1], strides = [1, 1]} : vector<16x4xi32> to vector<16x1xi32>
    %22 = vector.broadcast %21 : vector<16x1xi32> to vector<16x256xi32>
    %23 = arith.cmpi eq, %22, %1 : vector<16x256xi32>
    %24 = arith.extui %23 : vector<16x256xi1> to vector<16x256xi32>
    %25 = arith.sitofp %24 : vector<16x256xi32> to vector<16x256xf32>
    %26 = arith.addf %20, %25 : vector<16x256xf32>
    %cst_1 = arith.constant 2.500000e-01 : f32
    %27 = vector.broadcast %cst_1 : f32 to vector<16x256xf32>
    %28 = arith.mulf %26, %27 : vector<16x256xf32>
    %c0_2 = arith.constant 0 : index
    %c0_3 = arith.constant 0 : index
    %29 = vector.load %arg2[%c0_2, %c0_3] : memref<256x128xf32, #tpu.memory_space<vmem>>, vector<256x128xf32>
    %cst_4 = arith.constant dense<0.000000e+00> : vector<16x128xf32>
    %30 = tpu.matmul %28, %29, %cst_4 {dimension_numbers = #tpu.dot_dimension_numbers<[1], [0], [0], [1], [0, 0, 1, 1], [], []>} : vector<16x256xf32>, vector<256x128xf32>, vector<16x128xf32> -> vector<16x128xf32>
    %c0_5 = arith.constant 0 : index
    %c0_6 = arith.constant 0 : index
    %31 = vector.load %arg3[%c0_5, %c0_6] : memref<128x256xf32, #tpu.memory_space<vmem>>, vector<128x256xf32>
    %cst_7 = arith.constant dense<0.000000e+00> : vector<16x256xf32>
    %32 = tpu.matmul %30, %31, %cst_7 {dimension_numbers = #tpu.dot_dimension_numbers<[1], [0], [0], [1], [0, 0, 1, 1], [], []>} : vector<16x128xf32>, vector<128x256xf32>, vector<16x256xf32> -> vector<16x256xf32>
    %c0_8 = arith.constant 0 : index
    %c0_9 = arith.constant 0 : index
    %33 = vector.load %arg4[%c0_8, %c0_9] : memref<1x256xf32, #tpu.memory_space<vmem>>, vector<1x256xf32>
    %34 = vector.broadcast %33 : vector<1x256xf32> to vector<16x256xf32>
    %35 = arith.addf %32, %34 : vector<16x256xf32>
    %c0_10 = arith.constant 0 : index
    %c0_11 = arith.constant 0 : index
    %36 = vector.load %arg5[%c0_10, %c0_11] : memref<16x256xf32, #tpu.memory_space<vmem>>, vector<16x256xf32>
    tpu.vector_store %arg5[%c0_10, %c0_11], %35 {strides = array<i32>} : memref<16x256xf32, #tpu.memory_space<vmem>>, vector<16x256xf32>,
    return
  }
  func.func @transform_0(%arg0: i32) -> (i32, i32) {
    %c0_i32 = arith.constant 0 : i32
    %c0_i32_0 = arith.constant 0 : i32
    return %arg0, %c0_i32 : i32, i32
  }
  func.func @transform_1(%arg0: i32) -> (i32, i32) {
    %c0_i32 = arith.constant 0 : i32
    %c0_i32_0 = arith.constant 0 : i32
    %c0_i32_1 = arith.constant 0 : i32
    return %c0_i32, %c0_i32_0 : i32, i32
  }
  func.func @transform_2(%arg0: i32) -> (i32, i32) {
    %c0_i32 = arith.constant 0 : i32
    %c0_i32_0 = arith.constant 0 : i32
    %c0_i32_1 = arith.constant 0 : i32
    return %c0_i32, %c0_i32_0 : i32, i32
  }
  func.func @transform_3(%arg0: i32) -> (i32, i32) {
    %c0_i32 = arith.constant 0 : i32
    %c0_i32_0 = arith.constant 0 : i32
    %c0_i32_1 = arith.constant 0 : i32
    return %c0_i32, %c0_i32_0 : i32, i32
  }
  func.func @transform_4(%arg0: i32) -> (i32, i32) {
    %c0_i32 = arith.constant 0 : i32
    %c0_i32_0 = arith.constant 0 : i32
    return %arg0, %c0_i32 : i32, i32
  }
}

</mosaic_0001>

<llo_original>
// kernel: tpu_custom_call.1
$region0: #{tpu_custom_call.1}
  #allocation0 [shape = 'u32[]', space=smem, size = 0x4, offset = 0x4, fixed_abs, tag = 'smem constant byte address 0x4 - core index']
  #allocation1 [shape = 'u32[144,128]{1,0:T(1,128)}', space=vmem, size = 0x12000, scoped, tag = 'internal scratch']
  %s0 = inlined_call_operand.vmem [shape: s32[48,4], index: 0, kind: input, shape index: {}]
  %s1 = inlined_call_operand.hbm [shape: f32[256,128], index: 1, kind: input, shape index: {}]
  %s2 = inlined_call_operand.hbm [shape: f32[128,256], index: 2, kind: input, shape index: {}]
  %s3 = inlined_call_operand.vmem [shape: f32[1,256], index: 3, kind: input, shape index: {}]
  %s4 = inlined_call_operand.hbm [shape: f32[48,256], index: 4, kind: output, shape index: {}]
  %s5 = sld [smem:[#allocation0]]
  $region57: #{tpu_custom_call.1} parent=0
    _
  %s7 = ssub.s32 1, %s5
  %s8 = scalar_select 0, %s7, %s5
  $region1: #{tpu_custom_call.1} parent=0
    #allocation2 [shape = 'u8[131072]{0}', space=vmem, size = 0x20000, scoped, tag = 'input window, operand 1, single buffered']
    #allocation3 [shape = 's32[2]{0}', space=sflag, size = 0x8, scoped, tag = 'scoped memory for tpu_custom_call.1']
    #allocation4 [shape = 's32[2]{0}', space=sflag, size = 0x8, scoped, tag = 'scoped memory for tpu_custom_call.1']
    #allocation5 [shape = 'u8[131072]{0}', space=vmem, size = 0x20000, scoped, tag = 'input window, operand 2, single buffered']
    #allocation6 [shape = 's32[1]{0}', space=sflag, size = 0x4, scoped, tag = 'scoped memory for tpu_custom_call.1']
    #allocation7 [shape = 'u8[32768]{0}', space=vmem, size = 0x8000, scoped, tag = 'output window, operand 0']
    %9 = vsyncpa [#allocation3], 0
    %10 = vsyncpa [#allocation6], 0
    %11 = vsyncpa [#allocation4], 0
    %s12 = scalar_lea.sflag [#allocation4], 1
    %13 = vsyncpa %s12, 0
    loop: start=0, step=1, limit=5
    $region2: #{tpu_custom_call.1} parent=1 // loop_pre_header
      _
    $region3: #{tpu_custom_call.1} parent=1 // loop_header
      %s15 = sphi 0, %s19
      %p16 = scmp.ge.s32.totalorder %s15, 5
      %s25 = sphi 0, %s27
      %s28 = sphi 0, %s25
      %s29 = sphi 0, %s28
      %s45 = sphi 0, %s29
      %s49 = sphi 0, %s49
      %s51 = sphi 0, %s49
      %s52 = sphi 0, %s51
      %s66 = sphi 0, %s52
      %s70 = sphi 0, %s70
      %s72 = sphi 0, %s70
      %s73 = sphi 0, %s72
      %s87 = sphi 0, %s73
      %s91 = sphi 0, %s91
      %s93 = sphi 0, %s91
      %s94 = sphi 0, %s93
      %s108 = sphi 0, %s94
      %s114 = sphi 0, %s116
      %s117 = sphi 0, %s114
      %s118 = sphi 0, %s117
      %s134 = sphi 0, %s118
    $region4: #{tpu_custom_call.1} parent=1 // loop_header_branch
      %18 = sbr.rel (%p16) target = $region8
    $region5: #{tpu_custom_call.1} parent=1 // loop_body
      %s20 = ssub.s32 %s15, 1
      %s21 = ssub.s32 %s15, 2
      %s22 = sadd.s32 %s15, 1
      %s23 = ssub.s32 %s15, %s22
      %p24 = scmp.eq.s32.totalorder %s23, 0
      %s26 = sadd.s32 %s25, 1
      %s27 = scalar_select %p24, %s25, %s26
      %p30 = pneg %p24
      %p31 = scmp.eq.s32.totalorder %s15, 2
      %p32 = por %p30, %p31
      %p33 = scmp.ne.s32.totalorder %s25, %s28
      %p34 = scmp.eq.s32.totalorder %s15, 0
      %p35 = por %p33, %p34
      %p36 = scmp.ne.s32.totalorder %s25, %s28
      %p37 = scmp.eq.s32.totalorder %s20, 2
      %p38 = por %p36, %p37
      %p39 = scmp.ne.s32.totalorder %s28, %s29
      %p40 = scmp.eq.s32.totalorder %s20, 0
      %p41 = por %p39, %p40
      %p42 = scmp.ne.s32.totalorder %s28, %s29
      %p43 = scmp.eq.s32.totalorder %s21, 2
      %p44 = por %p42, %p43
      %p46 = scmp.ne.s32.totalorder %s29, %s45
      %p47 = scmp.eq.s32.totalorder %s21, 0
      %p48 = por %p46, %p47
      %s50 = sadd.s32 %s49, 1
      %p53 = scmp.eq.s32.totalorder %s15, 2
      %p54 = scmp.ne.s32.totalorder %s49, %s51
      %p55 = scmp.eq.s32.totalorder %s15, 0
      %p56 = por %p54, %p55
      %p57 = scmp.ne.s32.totalorder %s49, %s51
      %p58 = scmp.eq.s32.totalorder %s20, 2
      %p59 = por %p57, %p58
      %p60 = scmp.ne.s32.totalorder %s51, %s52
      %p61 = scmp.eq.s32.totalorder %s20, 0
      %p62 = por %p60, %p61
      %p63 = scmp.ne.s32.totalorder %s51, %s52
      %p64 = scmp.eq.s32.totalorder %s21, 2
      %p65 = por %p63, %p64
      %p67 = scmp.ne.s32.totalorder %s52, %s66
      %p68 = scmp.eq.s32.totalorder %s21, 0
      %p69 = por %p67, %p68
      %s71 = sadd.s32 %s70, 1
      %p74 = scmp.eq.s32.totalorder %s15, 2
      %p75 = scmp.ne.s32.totalorder %s70, %s72
      %p76 = scmp.eq.s32.totalorder %s15, 0
      %p77 = por %p75, %p76
      %p78 = scmp.ne.s32.totalorder %s70, %s72
      %p79 = scmp.eq.s32.totalorder %s20, 2
      %p80 = por %p78, %p79
      %p81 = scmp.ne.s32.totalorder %s72, %s73
      %p82 = scmp.eq.s32.totalorder %s20, 0
      %p83 = por %p81, %p82
      %p84 = scmp.ne.s32.totalorder %s72, %s73
      %p85 = scmp.eq.s32.totalorder %s21, 2
      %p86 = por %p84, %p85
      %p88 = scmp.ne.s32.totalorder %s73, %s87
      %p89 = scmp.eq.s32.totalorder %s21, 0
      %p90 = por %p88, %p89
      %s92 = sadd.s32 %s91, 1
      %p95 = scmp.eq.s32.totalorder %s15, 2
      %p96 = scmp.ne.s32.totalorder %s91, %s93
      %p97 = scmp.eq.s32.totalorder %s15, 0
      %p98 = por %p96, %p97
      %p99 = scmp.ne.s32.totalorder %s91, %s93
      %p100 = scmp.eq.s32.totalorder %s20, 2
      %p101 = por %p99, %p100
      %p102 = scmp.ne.s32.totalorder %s93, %s94
      %p103 = scmp.eq.s32.totalorder %s20, 0
      %p104 = por %p102, %p103
      %p105 = scmp.ne.s32.totalorder %s93, %s94
      %p106 = scmp.eq.s32.totalorder %s21, 2
      %p107 = por %p105, %p106
      %p109 = scmp.ne.s32.totalorder %s94, %s108
      %p110 = scmp.eq.s32.totalorder %s21, 0
      %p111 = por %p109, %p110
      %s112 = ssub.s32 %s15, %s22
      %p113 = scmp.eq.s32.totalorder %s112, 0
      %s115 = sadd.s32 %s114, 1
      %s116 = scalar_select %p113, %s114, %s115
      %p119 = pneg %p113
      %p120 = scmp.eq.s32.totalorder %s15, 2
      %p121 = por %p119, %p120
      %p122 = scmp.ne.s32.totalorder %s114, %s117
      %p123 = scmp.eq.s32.totalorder %s15, 0
      %p124 = por %p122, %p123
      %p125 = scmp.ne.s32.totalorder %s114, %s117
      %p126 = scmp.eq.s32.totalorder %s20, 2
      %p127 = por %p125, %p126
      %p128 = scmp.ne.s32.totalorder %s117, %s118
      %p129 = scmp.eq.s32.totalorder %s20, 0
      %p130 = por %p128, %p129
      %p131 = scmp.ne.s32.totalorder %s117, %s118
      %p132 = scmp.eq.s32.totalorder %s21, 2
      %p133 = por %p131, %p132
      %p135 = scmp.ne.s32.totalorder %s118, %s134
      %p136 = scmp.eq.s32.totalorder %s21, 0
      %p137 = por %p135, %p136
      %p138 = scmp.le.s32.totalorder 1, %s15
      %p139 = scmp.lt.s32.totalorder %s15, 4
      %p140 = pnand %p138, %p139
      %p141 = pneg %p140
      // Predicated region
      $region9: #{tpu_custom_call.1} parent=5 // pred_check
        _
      $region10: #{tpu_custom_call.1} parent=5 // pred_check_branch
        %143 = sbr.rel (%p140) target = $region12
      $region11: #{tpu_custom_call.1} parent=5 // pred_region
        %s144 = ssub.s32 %s15, 1
        // Predicated region
        $region13: #{tpu_custom_call.1} parent=11 // pred_check
          %p145 = pneg %p62
        $region14: #{tpu_custom_call.1} parent=11 // pred_check_branch
          %147 = sbr.rel (%p145) target = $region16
        $region15: #{tpu_custom_call.1} parent=11 // pred_region
          %s149 = ssub.s32 4096, 4096
          %150 = vsyncadd [#allocation3], %s149
          %s151 = sshll.u32 [#allocation2], 4
          %s152 = int_to_ptr.vmem [resolvable:$true] %s151
          %157 = dma.hbm_to_vmem [thread:$0]  %s1, 4096, %s152, [#allocation3], 128, 128, 8
        $region16: #{tpu_custom_call.1} parent=11 // pred_fallthru
          _
        // Predicated region
        $region17: #{tpu_custom_call.1} parent=11 // pred_check
          %p158 = pneg %p83
        $region18: #{tpu_custom_call.1} parent=11 // pred_check_branch
          %160 = sbr.rel (%p158) target = $region20
        $region19: #{tpu_custom_call.1} parent=11 // pred_region
          %s162 = ssub.s32 4096, 4096
          %163 = vsyncadd [#allocation6], %s162
          %s164 = sshll.u32 [#allocation5], 4
          %s165 = int_to_ptr.vmem [resolvable:$true] %s164
          %170 = dma.hbm_to_vmem [thread:$0]  %s2, 4096, %s165, [#allocation6], 256, 256, 16
        $region20: #{tpu_custom_call.1} parent=11 // pred_fallthru
          _
        // Predicated region
        $region21: #{tpu_custom_call.1} parent=11 // pred_check
          %p171 = pneg %p104
        $region22: #{tpu_custom_call.1} parent=11 // pred_check_branch
          %173 = sbr.rel (%p171) target = $region24
        $region23: #{tpu_custom_call.1} parent=11 // pred_region
          _
        $region24: #{tpu_custom_call.1} parent=11 // pred_fallthru
          _
      $region12: #{tpu_custom_call.1} parent=5 // pred_fallthru
        _
      %p174 = scmp.lt.s32.totalorder %s15, 3
      // Predicated region
      $region25: #{tpu_custom_call.1} parent=5 // pred_check
        %p175 = pneg %p174
      $region26: #{tpu_custom_call.1} parent=5 // pred_check_branch
        %177 = sbr.rel (%p175) target = $region28
      $region27: #{tpu_custom_call.1} parent=5 // pred_region
        // Predicated region
        $region29: #{tpu_custom_call.1} parent=27 // pred_check
          %p178 = pneg %p35
        $region30: #{tpu_custom_call.1} parent=27 // pred_check_branch
          %180 = sbr.rel (%p178) target = $region32
        $region31: #{tpu_custom_call.1} parent=27 // pred_region
          %s181 = smul.u32 2, %s15
          %p182 = scmp.lt.s32.totalorder %s181, 5
          %s183 = scalar_select %p182, %s181, 5
          %s184 = smul.addr %s183, 8
          %s185 = scalar_lea.vmem %s0, %s184
          %s186 = smul.u32 2, %s15
        $region32: #{tpu_custom_call.1} parent=27 // pred_fallthru
          _
      $region28: #{tpu_custom_call.1} parent=5 // pred_fallthru
        _
      %p187 = scmp.le.s32.totalorder 1, %s15
      %p188 = scmp.lt.s32.totalorder %s15, 4
      %p189 = pnand %p187, %p188
      %p190 = pneg %p189
      // Predicated region
      $region33: #{tpu_custom_call.1} parent=5 // pred_check
        _
      $region34: #{tpu_custom_call.1} parent=5 // pred_check_branch
        %192 = sbr.rel (%p189) target = $region36
      $region35: #{tpu_custom_call.1} parent=5 // pred_region
        %s193 = ssub.s32 %s15, 1
        // Predicated region
        $region37: #{tpu_custom_call.1} parent=35 // pred_check
          %p194 = pneg %p62
        $region38: #{tpu_custom_call.1} parent=35 // pred_check_branch
          %196 = sbr.rel (%p194) target = $region40
        $region39: #{tpu_custom_call.1} parent=35 // pred_region
          %197 = dma.done [#allocation3], 4096
        $region40: #{tpu_custom_call.1} parent=35 // pred_fallthru
          _
        // Predicated region
        $region41: #{tpu_custom_call.1} parent=35 // pred_check
          %p198 = pneg %p83
        $region42: #{tpu_custom_call.1} parent=35 // pred_check_branch
          %200 = sbr.rel (%p198) target = $region44
        $region43: #{tpu_custom_call.1} parent=35 // pred_region
          %201 = dma.done [#allocation6], 4096
        $region44: #{tpu_custom_call.1} parent=35 // pred_fallthru
          _
        %s202 = smul.u32 2, %s20
        %p203 = scmp.lt.s32.totalorder %s202, 5
        %s204 = scalar_select %p203, %s202, 5
        %s205 = smul.addr %s204, 8
        %s206 = scalar_lea.vmem %s0, %s205
        %p207 = pneg %p41
        %p208 = pneg %p38
        %p209 = pneg %p62
        %p210 = pneg %p59
        %p211 = pneg %p83
        %p212 = pneg %p80
        %p213 = pneg %p104
        %p214 = pneg %p101
        %p215 = pneg %p130
        %p216 = pneg %p127
        %s217 = sand.u32 %s117, 1
        %s218 = scalar_lea.sflag [#allocation4], %s217
        %s219 = sand.u32 %s117, 1
        %s220 = smul.addr %s219, 32
        %s221 = scalar_lea.vmem [#allocation7], %s220
        %s222 = smul.u32 2, %s20
        %p223 = scmp.lt.s32.totalorder %s222, 5
        %s224 = scalar_select %p223, %s222, 5
        %s225 = smul.addr %s224, 8
        %s226 = scalar_lea.vmem %s0, %s225
        %s227 = smul.u32 2, %s20
        %s228 = smul.u32 2, %s20
        %v229 = vld [vmem:[%s226] sm:$0xff]
        %v230 = vld [vmem:[%s226 + $0x8] sm:$0xff]
        %v231 = vlaneseq
        %v232 = vand.u32 %v231, 127
        %v233 = vadd.s32 %v232, 128
        %234 = vset.pattern.permute.xlu0 0
        %235 = vperm.xlu0 %234, %v229
        %v236 = vpop.permute.xlu0 %235
        %237 = vset.pattern.permute.xlu0 0
        %238 = vperm.xlu0 %237, %v230
        %v239 = vpop.permute.xlu0 %238
        %vm240 = vcmp.eq.s32.totalorder %v236, %v232
        %vm241 = vcmp.eq.s32.totalorder %v236, %v233
        %vm242 = vcmp.eq.s32.totalorder %v239, %v232
        %vm243 = vcmp.eq.s32.totalorder %v239, %v233
        %v244 = vsel %vm240, 1, 0
        %v245 = vsel %vm241, 1, 0
        %v246 = vsel %vm242, 1, 0
        %v247 = vsel %vm243, 1, 0
        %v248 = vcvt.s32.f32 %v244
        %v249 = vcvt.s32.f32 %v245
        %v250 = vcvt.s32.f32 %v246
        %v251 = vcvt.s32.f32 %v247
        %v252 = vadd.f32 %v248, 0.0
        %v253 = vadd.f32 %v249, 0.0
        %v254 = vadd.f32 %v250, 0.0
        %v255 = vadd.f32 %v251, 0.0
        %256 = vset.pattern.permute.xlu0 1
        %257 = vperm.xlu0 %256, %v229
        %v258 = vpop.permute.xlu0 %257
        %259 = vset.pattern.permute.xlu0 1
        %260 = vperm.xlu0 %259, %v230
        %v261 = vpop.permute.xlu0 %260
        %vm262 = vcmp.eq.s32.totalorder %v258, %v232
        %vm263 = vcmp.eq.s32.totalorder %v258, %v233
        %vm264 = vcmp.eq.s32.totalorder %v261, %v232
        %vm265 = vcmp.eq.s32.totalorder %v261, %v233
        %v266 = vsel %vm262, 1, 0
        %v267 = vsel %vm263, 1, 0
        %v268 = vsel %vm264, 1, 0
        %v269 = vsel %vm265, 1, 0
        %v270 = vcvt.s32.f32 %v266
        %v271 = vcvt.s32.f32 %v267
        %v272 = vcvt.s32.f32 %v268
        %v273 = vcvt.s32.f32 %v269
        %v274 = vadd.f32 %v252, %v270
        %v275 = vadd.f32 %v253, %v271
        %v276 = vadd.f32 %v254, %v272
        %v277 = vadd.f32 %v255, %v273
        %278 = vset.pattern.permute.xlu0 2
        %279 = vperm.xlu0 %278, %v229
        %v280 = vpop.permute.xlu0 %279
        %281 = vset.pattern.permute.xlu0 2
        %282 = vperm.xlu0 %281, %v230
        %v283 = vpop.permute.xlu0 %282
        %vm284 = vcmp.eq.s32.totalorder %v280, %v232
        %vm285 = vcmp.eq.s32.totalorder %v280, %v233
        %vm286 = vcmp.eq.s32.totalorder %v283, %v232
        %vm287 = vcmp.eq.s32.totalorder %v283, %v233
        %v288 = vsel %vm284, 1, 0
        %v289 = vsel %vm285, 1, 0
        %v290 = vsel %vm286, 1, 0
        %v291 = vsel %vm287, 1, 0
        %v292 = vcvt.s32.f32 %v288
        %v293 = vcvt.s32.f32 %v289
        %v294 = vcvt.s32.f32 %v290
        %v295 = vcvt.s32.f32 %v291
        %v296 = vadd.f32 %v274, %v292
        %v297 = vadd.f32 %v275, %v293
        %v298 = vadd.f32 %v276, %v294
        %v299 = vadd.f32 %v277, %v295
        %300 = vset.pattern.permute.xlu0 3
        %301 = vperm.xlu0 %300, %v229
        %v302 = vpop.permute.xlu0 %301
        %303 = vset.pattern.permute.xlu0 3
        %304 = vperm.xlu0 %303, %v230
        %v305 = vpop.permute.xlu0 %304
        %vm306 = vcmp.eq.s32.totalorder %v302, %v232
        %vm307 = vcmp.eq.s32.totalorder %v302, %v233
        %vm308 = vcmp.eq.s32.totalorder %v305, %v232
        %vm309 = vcmp.eq.s32.totalorder %v305, %v233
        %v310 = vsel %vm306, 1, 0
        %v311 = vsel %vm307, 1, 0
        %v312 = vsel %vm308, 1, 0
        %v313 = vsel %vm309, 1, 0
        %v314 = vcvt.s32.f32 %v310
        %v315 = vcvt.s32.f32 %v311
        %v316 = vcvt.s32.f32 %v312
        %v317 = vcvt.s32.f32 %v313
        %v318 = vadd.f32 %v296, %v314
        %v319 = vadd.f32 %v297, %v315
        %v320 = vadd.f32 %v298, %v316
        %v321 = vadd.f32 %v299, %v317
        %v322 = vmul.f32 %v318, 0.25
        %v323 = vmul.f32 %v319, 0.25
        %v324 = vmul.f32 %v320, 0.25
        %v325 = vmul.f32 %v321, 0.25
        %v326 = vld [vmem:[#allocation2] sm:$0xff]
        %v327 = vld [vmem:[#allocation2 + $0x8] sm:$0xff]
        %v328 = vld [vmem:[#allocation2 + $0x10] sm:$0xff]
        %v329 = vld [vmem:[#allocation2 + $0x18] sm:$0xff]
        %v330 = vld [vmem:[#allocation2 + $0x20] sm:$0xff]
        %v331 = vld [vmem:[#allocation2 + $0x28] sm:$0xff]
        %v332 = vld [vmem:[#allocation2 + $0x30] sm:$0xff]
        %v333 = vld [vmem:[#allocation2 + $0x38] sm:$0xff]
        %v334 = vld [vmem:[#allocation2 + $0x40] sm:$0xff]
        %v335 = vld [vmem:[#allocation2 + $0x48] sm:$0xff]
        %v336 = vld [vmem:[#allocation2 + $0x50] sm:$0xff]
        %v337 = vld [vmem:[#allocation2 + $0x58] sm:$0xff]
        %v338 = vld [vmem:[#allocation2 + $0x60] sm:$0xff]
        %v339 = vld [vmem:[#allocation2 + $0x68] sm:$0xff]
        %v340 = vld [vmem:[#allocation2 + $0x70] sm:$0xff]
        %v341 = vld [vmem:[#allocation2 + $0x78] sm:$0xff]
        %v342 = vld [vmem:[#allocation2 + $0x80] sm:$0xff]
        %v343 = vld [vmem:[#allocation2 + $0x88] sm:$0xff]
        %v344 = vld [vmem:[#allocation2 + $0x90] sm:$0xff]
        %v345 = vld [vmem:[#allocation2 + $0x98] sm:$0xff]
        %v346 = vld [vmem:[#allocation2 + $0xa0] sm:$0xff]
        %v347 = vld [vmem:[#allocation2 + $0xa8] sm:$0xff]
        %v348 = vld [vmem:[#allocation2 + $0xb0] sm:$0xff]
        %v349 = vld [vmem:[#allocation2 + $0xb8] sm:$0xff]
        %v350 = vld [vmem:[#allocation2 + $0xc0] sm:$0xff]
        %v351 = vld [vmem:[#allocation2 + $0xc8] sm:$0xff]
        %v352 = vld [vmem:[#allocation2 + $0xd0] sm:$0xff]
        %v353 = vld [vmem:[#allocation2 + $0xd8] sm:$0xff]
        %v354 = vld [vmem:[#allocation2 + $0xe0] sm:$0xff]
        %v355 = vld [vmem:[#allocation2 + $0xe8] sm:$0xff]
        %v356 = vld [vmem:[#allocation2 + $0xf0] sm:$0xff]
        %v357 = vld [vmem:[#allocation2 + $0xf8] sm:$0xff]
        %358 = vmatprep.subr.mxu0 0.0
        %359 = vmatpush1.msra.mxu0 %v326
        %360 = vmatprep.subr.mxu0 0.0
        %361 = vmatpush1.msra.mxu0 %v327
        %362 = vmatprep.subr.mxu0 0.0
        %363 = vmatpush1.msra.mxu0 %v328
        %364 = vmatprep.subr.mxu0 0.0
        %365 = vmatpush1.msra.mxu0 %v329
        %366 = vmatprep.subr.mxu0 0.0
        %367 = vmatpush1.msra.mxu0 %v330
        %368 = vmatprep.subr.mxu0 0.0
        %369 = vmatpush1.msra.mxu0 %v331
        %370 = vmatprep.subr.mxu0 0.0
        %371 = vmatpush1.msra.mxu0 %v332
        %372 = vmatprep.subr.mxu0 0.0
        %373 = vmatpush1.msra.mxu0 %v333
        %374 = vmatprep.subr.mxu0 0.0
        %375 = vmatpush1.msra.mxu0 %v334
        %376 = vmatprep.subr.mxu0 0.0
        %377 = vmatpush1.msra.mxu0 %v335
        %378 = vmatprep.subr.mxu0 0.0
        %379 = vmatpush1.msra.mxu0 %v336
        %380 = vmatprep.subr.mxu0 0.0
        %381 = vmatpush1.msra.mxu0 %v337
        %382 = vmatprep.subr.mxu0 0.0
        %383 = vmatpush1.msra.mxu0 %v338
        %384 = vmatprep.subr.mxu0 0.0
        %385 = vmatpush1.msra.mxu0 %v339
        %386 = vmatprep.subr.mxu0 0.0
        %387 = vmatpush1.msra.mxu0 %v340
        %388 = vmatprep.subr.mxu0 0.0
        %389 = vmatpush1.msra.mxu0 %v341
        %390 = vmatprep.subr.mxu0 0.0
        %391 = vmatpush1.msra.mxu0 %v342
        %392 = vmatprep.subr.mxu0 0.0
        %393 = vmatpush1.msra.mxu0 %v343
        %394 = vmatprep.subr.mxu0 0.0
        %395 = vmatpush1.msra.mxu0 %v344
        %396 = vmatprep.subr.mxu0 0.0
        %397 = vmatpush1.msra.mxu0 %v345
        %398 = vmatprep.subr.mxu0 0.0
        %399 = vmatpush1.msra.mxu0 %v346
        %400 = vmatprep.subr.mxu0 0.0
        %401 = vmatpush1.msra.mxu0 %v347
        %402 = vmatprep.subr.mxu0 0.0
        %403 = vmatpush1.msra.mxu0 %v348
        %404 = vmatprep.subr.mxu0 0.0
        %405 = vmatpush1.msra.mxu0 %v349
        %406 = vmatprep.subr.mxu0 0.0
        %407 = vmatpush1.msra.mxu0 %v350
        %408 = vmatprep.subr.mxu0 0.0
        %409 = vmatpush1.msra.mxu0 %v351
        %410 = vmatprep.subr.mxu0 0.0
        %411 = vmatpush1.msra.mxu0 %v352
        %412 = vmatprep.subr.mxu0 0.0
        %413 = vmatpush1.msra.mxu0 %v353
        %414 = vmatprep.subr.mxu0 0.0
        %415 = vmatpush1.msra.mxu0 %v354
        %416 = vmatprep.subr.mxu0 0.0
        %417 = vmatpush1.msra.mxu0 %v355
        %418 = vmatprep.subr.mxu0 0.0
        %419 = vmatpush1.msra.mxu0 %v356
        %420 = vmatprep.subr.mxu0 0.0
        %421 = vmatpush1.msra.mxu0 %v357
        %422 = vmatprep.mubr.f32.mxu0 %v323
        %423 = vmatmul.mubr.f32.gmra.mrb[0].mxu0 %v322
        %v424 = vpop.f32.mrb[0].mxu0
        %v425 = vadd.f32 0.0, %v424
        %v426 = vpop.f32.mrb[0].mxu0
        %427 = vmatprep.mubr.f32.mxu0 %v325
        %428 = vmatmul.mubr.f32.gmra.mrb[0].mxu0 %v324
        %v429 = vpop.f32.mrb[0].mxu0
        %v430 = vadd.f32 0.0, %v429
        %v431 = vpop.f32.mrb[0].mxu0
        %432 = vdwg.mxu0
        %v433 = vld [vmem:[#allocation5] sm:$0xff]
        %v434 = vld [vmem:[#allocation5 + $0x8] sm:$0xff]
        %v435 = vld [vmem:[#allocation5 + $0x10] sm:$0xff]
        %v436 = vld [vmem:[#allocation5 + $0x18] sm:$0xff]
        %v437 = vld [vmem:[#allocation5 + $0x20] sm:$0xff]
        %v438 = vld [vmem:[#allocation5 + $0x28] sm:$0xff]
        %v439 = vld [vmem:[#allocation5 + $0x30] sm:$0xff]
        %v440 = vld [vmem:[#allocation5 + $0x38] sm:$0xff]
        %v441 = vld [vmem:[#allocation5 + $0x40] sm:$0xff]
        %v442 = vld [vmem:[#allocation5 + $0x48] sm:$0xff]
        %v443 = vld [vmem:[#allocation5 + $0x50] sm:$0xff]
        %v444 = vld [vmem:[#allocation5 + $0x58] sm:$0xff]
        %v445 = vld [vmem:[#allocation5 + $0x60] sm:$0xff]
        %v446 = vld [vmem:[#allocation5 + $0x68] sm:$0xff]
        %v447 = vld [vmem:[#allocation5 + $0x70] sm:$0xff]
        %v448 = vld [vmem:[#allocation5 + $0x78] sm:$0xff]
        %v449 = vld [vmem:[#allocation5 + $0x80] sm:$0xff]
        %v450 = vld [vmem:[#allocation5 + $0x88] sm:$0xff]
        %v451 = vld [vmem:[#allocation5 + $0x90] sm:$0xff]
        %v452 = vld [vmem:[#allocation5 + $0x98] sm:$0xff]
        %v453 = vld [vmem:[#allocation5 + $0xa0] sm:$0xff]
        %v454 = vld [vmem:[#allocation5 + $0xa8] sm:$0xff]
        %v455 = vld [vmem:[#allocation5 + $0xb0] sm:$0xff]
        %v456 = vld [vmem:[#allocation5 + $0xb8] sm:$0xff]
        %v457 = vld [vmem:[#allocation5 + $0xc0] sm:$0xff]
        %v458 = vld [vmem:[#allocation5 + $0xc8] sm:$0xff]
        %v459 = vld [vmem:[#allocation5 + $0xd0] sm:$0xff]
        %v460 = vld [vmem:[#allocation5 + $0xd8] sm:$0xff]
        %v461 = vld [vmem:[#allocation5 + $0xe0] sm:$0xff]
        %v462 = vld [vmem:[#allocation5 + $0xe8] sm:$0xff]
        %v463 = vld [vmem:[#allocation5 + $0xf0] sm:$0xff]
        %v464 = vld [vmem:[#allocation5 + $0xf8] sm:$0xff]
        %v465 = vld [vmem:[%s3] sm:$0x3]
        %v467 = vlaneseq
        %v468 = vshrl.u32 %v467, 7
        %v469 = vsub.s32 0, %v468
        %v470 = vrot.slane %v465, %v469
        %v471 = vlaneseq
        %v472 = vshrl.u32 %v471, 7
        %v473 = vsub.s32 1, %v472
        %v474 = vrot.slane %v465, %v473
        %477 = vmatprep.subr.mxu0 %v434
        %478 = vmatpush1.msra.mxu0 %v433
        %479 = vmatprep.subr.mxu0 %v436
        %480 = vmatpush1.msra.mxu0 %v435
        %481 = vmatprep.subr.mxu0 %v438
        %482 = vmatpush1.msra.mxu0 %v437
        %483 = vmatprep.subr.mxu0 %v440
        %484 = vmatpush1.msra.mxu0 %v439
        %485 = vmatprep.subr.mxu0 %v442
        %486 = vmatpush1.msra.mxu0 %v441
        %487 = vmatprep.subr.mxu0 %v444
        %488 = vmatpush1.msra.mxu0 %v443
        %489 = vmatprep.subr.mxu0 %v446
        %490 = vmatpush1.msra.mxu0 %v445
        %491 = vmatprep.subr.mxu0 %v448
        %492 = vmatpush1.msra.mxu0 %v447
        %493 = vmatprep.subr.mxu0 %v450
        %494 = vmatpush1.msra.mxu0 %v449
        %495 = vmatprep.subr.mxu0 %v452
        %496 = vmatpush1.msra.mxu0 %v451
        %497 = vmatprep.subr.mxu0 %v454
        %498 = vmatpush1.msra.mxu0 %v453
        %499 = vmatprep.subr.mxu0 %v456
        %500 = vmatpush1.msra.mxu0 %v455
        %501 = vmatprep.subr.mxu0 %v458
        %502 = vmatpush1.msra.mxu0 %v457
        %503 = vmatprep.subr.mxu0 %v460
        %504 = vmatpush1.msra.mxu0 %v459
        %505 = vmatprep.subr.mxu0 %v462
        %506 = vmatpush1.msra.mxu0 %v461
        %507 = vmatprep.subr.mxu0 %v464
        %508 = vmatpush1.msra.mxu0 %v463
        %509 = vmatprep.subr.mxu0 0.0
        %510 = vmatpush1.msra.mxu0 0.0
        %511 = vmatprep.subr.mxu0 0.0
        %512 = vmatpush1.msra.mxu0 0.0
        %513 = vmatprep.subr.mxu0 0.0
        %514 = vmatpush1.msra.mxu0 0.0
        %515 = vmatprep.subr.mxu0 0.0
        %516 = vmatpush1.msra.mxu0 0.0
        %517 = vmatprep.subr.mxu0 0.0
        %518 = vmatpush1.msra.mxu0 0.0
        %519 = vmatprep.subr.mxu0 0.0
        %520 = vmatpush1.msra.mxu0 0.0
        %521 = vmatprep.subr.mxu0 0.0
        %522 = vmatpush1.msra.mxu0 0.0
        %523 = vmatprep.subr.mxu0 0.0
        %524 = vmatpush1.msra.mxu0 0.0
        %525 = vmatprep.subr.mxu0 0.0
        %526 = vmatpush1.msra.mxu0 0.0
        %527 = vmatprep.subr.mxu0 0.0
        %528 = vmatpush1.msra.mxu0 0.0
        %529 = vmatprep.subr.mxu0 0.0
        %530 = vmatpush1.msra.mxu0 0.0
        %531 = vmatprep.subr.mxu0 0.0
        %532 = vmatpush1.msra.mxu0 0.0
        %533 = vmatprep.subr.mxu0 0.0
        %534 = vmatpush1.msra.mxu0 0.0
        %535 = vmatprep.subr.mxu0 0.0
        %536 = vmatpush1.msra.mxu0 0.0
        %537 = vmatprep.subr.mxu0 0.0
        %538 = vmatpush1.msra.mxu0 0.0
        %539 = vmatprep.subr.mxu0 0.0
        %540 = vmatpush1.msra.mxu0 0.0
        %541 = vmatprep.mubr.f32.mxu0 0.0
        %542 = vmatmul.mubr.f32.gmra.mrb[0].mxu0 %v425
        %v543 = vpop.f32.mrb[0].mxu0
        %v544 = vadd.f32 %v470, %v543
        %v545 = vpop.f32.mrb[0].mxu0
        %v546 = vadd.f32 %v474, %v545
        %547 = vmatprep.mubr.f32.mxu0 0.0
        %548 = vmatmul.mubr.f32.gmra.mrb[0].mxu0 %v430
        %v549 = vpop.f32.mrb[0].mxu0
        %v550 = vadd.f32 %v470, %v549
        %v551 = vpop.f32.mrb[0].mxu0
        %v552 = vadd.f32 %v474, %v551
        %553 = vdwg.mxu0
        %554 = vst [vmem:[%s221] sm:$0xff] %v544
        %555 = vst [vmem:[%s221 + $0x8] sm:$0xff] %v546
        %556 = vst [vmem:[%s221 + $0x10] sm:$0xff] %v550
        %557 = vst [vmem:[%s221 + $0x18] sm:$0xff] %v552
        %s558 = sand.u32 %s117, 1
        %s559 = scalar_lea.sflag [#allocation4], %s558
        %s560 = sand.u32 %s117, 1
        %s561 = smul.addr %s560, 32
        %s562 = scalar_lea.vmem [#allocation7], %s561
        // Predicated region
        $region45: #{tpu_custom_call.1} parent=35 // pred_check
          %p563 = pneg %p127
        $region46: #{tpu_custom_call.1} parent=35 // pred_check_branch
          %565 = sbr.rel (%p563) target = $region48
        $region47: #{tpu_custom_call.1} parent=35 // pred_region
          %s566 = smul.u32 2, %s20
          %s568 = ssub.s32 512, 512
          %569 = vsyncadd %s559, %s568
          %s570 = smul.addr %s566, 2
          %s571 = smul.addr %s570, 128
          %s572 = scalar_lea.hbm %s4, %s571
          %s573 = sshll.u32 %s562, 4
          %s574 = int_to_ptr.vmem [resolvable:$true] %s573
          %579 = dma.vmem_to_hbm [thread:$0]  %s574, 512, %s572, %s559, 256, 256, 16
        $region48: #{tpu_custom_call.1} parent=35 // pred_fallthru
          _
      $region36: #{tpu_custom_call.1} parent=5 // pred_fallthru
        _
      %p580 = scmp.le.s32.totalorder 2, %s15
      // Predicated region
      $region49: #{tpu_custom_call.1} parent=5 // pred_check
        %p581 = pneg %p580
      $region50: #{tpu_custom_call.1} parent=5 // pred_check_branch
        %583 = sbr.rel (%p581) target = $region52
      $region51: #{tpu_custom_call.1} parent=5 // pred_region
        %s584 = ssub.s32 %s15, 2
        // Predicated region
        $region53: #{tpu_custom_call.1} parent=51 // pred_check
          %p585 = pneg %p133
        $region54: #{tpu_custom_call.1} parent=51 // pred_check_branch
          %587 = sbr.rel (%p585) target = $region56
        $region55: #{tpu_custom_call.1} parent=51 // pred_region
          %s588 = sand.u32 %s118, 1
          %s589 = scalar_lea.sflag [#allocation4], %s588
          %s590 = sand.u32 %s118, 1
          %s591 = smul.addr %s590, 32
          %s592 = scalar_lea.vmem [#allocation7], %s591
          %593 = dma.done %s589, 512
        $region56: #{tpu_custom_call.1} parent=51 // pred_fallthru
          _
      $region52: #{tpu_custom_call.1} parent=5 // pred_fallthru
        _
    $region6: #{tpu_custom_call.1} parent=1 // loop_footer
      %s19 = sadd.s32 1, %s15
    $region7: #{tpu_custom_call.1} parent=1 // loop_footer_branch
      %14 = sbr.rel target = $region3
    $region8: #{tpu_custom_call.1} parent=1 // loop_exit
      _
    %594 = vsyncpa [#allocation3], 1
    %s595 = scalar_lea.sflag [#allocation3], 1
    %596 = vsyncpa %s595, 1
    %597 = vsyncpa [#allocation6], 1
    %598 = vsyncpa [#allocation4], 1
    %s599 = scalar_lea.sflag [#allocation4], 1
    %600 = vsyncpa %s599, 1

</llo_original>
